<compile_context>
chip_gen: v7x
topology: tpu7x:2x2x1
jax: 0.10.0
libtpu: 0.0.40
codegen_flags: <defaults>
</compile_context>

<pallas_src>
import functools

import jax
import jax.numpy as jnp
from jax.experimental import pallas as pl
from jax.experimental.pallas import tpu as pltpu


def _dwsep_conv_kernel(x_ref, wdw_ref, wpw_ref, bias_ref, o_ref, *,
                       TH, Wo, KH, KW, Cin):
    """One (batch, row-tile) step of the fused depthwise-separable conv.

    x_ref:    (1, Hp, Wp, Cin)   zero-padded input, channels-last (lanes = Cin)
    wdw_ref:  (KH*KW, Cin)       depthwise taps, one row per (kh, kw)
    wpw_ref:  (Cin, Cout)        true pointwise 1x1 weight (no replication)
    bias_ref: (1, Cout)          fused bias = b_pw + b_dw @ W_pw
    o_ref:    (1, TH*Wo, Cout)   output rows = pixels of this row tile
    """
    r = pl.program_id(1)
    row0 = pl.multiple_of(r * TH, TH)

    # Single hoisted load of the (TH + KH - 1)-row halo'd input window; all
    # taps below are static slices of this resident value, not per-tap ref
    # loads from VMEM.
    xt = x_ref[0, pl.ds(row0, TH + KH - 1), :, :]              # (TH+KH-1, Wp, Cin)
    w_taps = wdw_ref[...].astype(jnp.float32)                  # (KH*KW, Cin), one load

    # Depthwise: plain VPU multiply-adds on a small (TH, Wo, Cin) f32
    # accumulator.  For tiny Cin (toy shape) the lane occupancy is low, but
    # for the realistic Cin >= 128 regime this layout is fully lane-dense.
    acc = jnp.zeros((TH, Wo, Cin), jnp.float32)
    for kh in range(KH):
        for kw in range(KW):
            t = kh * KW + kw
            patch = xt[kh:kh + TH, kw:kw + Wo, :].astype(jnp.float32)
            acc = acc + patch * w_taps[t, :]                   # lane-vector broadcast

    # Pointwise 1x1: the single MXU matmul of the kernel, (pixels, Cin) x
    # (Cin, Cout) with the true weight.  The reshape only merges leading dims
    # (layout-preserving when Wo % 8 == 0), so no relayout before the dot.
    dw = acc.reshape(TH * Wo, Cin)
    out = jnp.dot(dw, wpw_ref[...].astype(jnp.float32),
                  preferred_element_type=jnp.float32)
    out = out + bias_ref[...].astype(jnp.float32)
    o_ref[0] = out.astype(o_ref.dtype)


def depthwise_separable_conv(x_nchw, w_dw, b_dw, w_pw, b_pw, *,
                             stride=1, padding=1, row_tile=8):
    """Pallas fused depthwise-separable conv matching the PyTorch module.

    x_nchw: (N, Cin, H, W)
    w_dw:   (Cin, 1, KH, KW)   depthwise weight (PyTorch layout, groups=Cin)
    b_dw:   (Cin,)
    w_pw:   (Cout, Cin, 1, 1)  pointwise weight
    b_pw:   (Cout,)
    returns (N, Cout, Ho, Wo)
    """
    N, Cin, H, W = x_nchw.shape
    KH, KW = w_dw.shape[2], w_dw.shape[3]
    Cout = w_pw.shape[0]
    assert w_dw.shape[0] == Cin and w_dw.shape[1] == 1
    assert w_pw.shape[1] == Cin
    # TODO(synk): stride > 1 would need strided tap slices; module default stride=1 only.
    assert stride == 1

    Ho = H + 2 * padding - KH + 1
    Wo = W + 2 * padding - KW + 1
    # Row tile for the second ("parallel") grid axis; fall back to one tile
    # per batch element if Ho is not divisible.
    TH = row_tile if (row_tile is not None and 0 < row_tile <= Ho
                      and Ho % row_tile == 0) else Ho

    # ---- wrapper-side layout glue (cheap XLA ops on KB-sized tensors) ------
    # NCHW -> NHWC (channels-last: channels land on the lane axis), zero-pad.
    x_nhwc = jnp.transpose(x_nchw, (0, 2, 3, 1))                      # (N, H, W, Cin)
    x_pad = jnp.pad(x_nhwc, ((0, 0), (padding, padding), (padding, padding), (0, 0)))
    Hp, Wp = x_pad.shape[1], x_pad.shape[2]

    # Depthwise taps: taps[kh*KW + kw, c] = w_dw[c, 0, kh, kw]  (no replication).
    w_dw_taps = jnp.transpose(w_dw[:, 0, :, :], (1, 2, 0)).reshape(KH * KW, Cin)
    # True pointwise weight (Cin, Cout)  (no block-diagonal kron).
    w_pw_mat = jnp.transpose(w_pw[:, :, 0, 0])                        # (Cin, Cout)
    # Fold the depthwise bias through the (linear) pointwise conv:
    #   (dw + b_dw) @ W + b_pw == dw @ W + (b_dw @ W + b_pw)
    b_fused = (b_pw + b_dw @ w_pw_mat).reshape(1, Cout).astype(jnp.float32)

    kernel = functools.partial(_dwsep_conv_kernel,
                               TH=TH, Wo=Wo, KH=KH, KW=KW, Cin=Cin)

    out_flat = pl.pallas_call(
        kernel,
        out_shape=jax.ShapeDtypeStruct((N, Ho * Wo, Cout), x_nchw.dtype),
        grid_spec=pltpu.PrefetchScalarGridSpec(
            num_scalar_prefetch=0,
            grid=(N, Ho // TH),
            in_specs=[
                pl.BlockSpec((1, Hp, Wp, Cin), lambda n, r: (n, 0, 0, 0)),
                pl.BlockSpec((KH * KW, Cin), lambda n, r: (0, 0)),
                pl.BlockSpec((Cin, Cout), lambda n, r: (0, 0)),
                pl.BlockSpec((1, Cout), lambda n, r: (0, 0)),
            ],
            out_specs=pl.BlockSpec((1, TH * Wo, Cout), lambda n, r: (n, r, 0)),
        ),
        compiler_params=pltpu.CompilerParams(
            dimension_semantics=("parallel", "parallel"),
        ),
    )(x_pad, w_dw_taps, w_pw_mat, b_fused)

    # (N, Ho*Wo, Cout) -> (N, Cout, Ho, Wo)
    out = out_flat.reshape(N, Ho, Wo, Cout)
    return jnp.transpose(out, (0, 3, 1, 2))


if __name__ == "__main__":
    # Shapes consistent with DepthwiseSeparableConv(in_channels=4, out_channels=8,
    # kernel_size=3, stride=1, padding=1) on a (2, 4, 16, 16) input.
    N, Cin, H, W = 2, 4, 16, 16
    Cout, K = 8, 3
    stride, padding = 1, 1

    key = jax.random.PRNGKey(0)
    kx, kw1, kb1, kw2, kb2 = jax.random.split(key, 5)

    x = jax.random.normal(kx, (N, Cin, H, W), dtype=jnp.float32)

    # PyTorch-style uniform init (bound = 1/sqrt(fan_in)).
    bound_dw = 1.0 / ((1 * K * K) ** 0.5)
    w_dw = jax.random.uniform(kw1, (Cin, 1, K, K), minval=-bound_dw, maxval=bound_dw,
                              dtype=jnp.float32)
    b_dw = jax.random.uniform(kb1, (Cin,), minval=-bound_dw, maxval=bound_dw,
                              dtype=jnp.float32)
    bound_pw = 1.0 / (Cin ** 0.5)
    w_pw = jax.random.uniform(kw2, (Cout, Cin, 1, 1), minval=-bound_pw, maxval=bound_pw,
                              dtype=jnp.float32)
    b_pw = jax.random.uniform(kb2, (Cout,), minval=-bound_pw, maxval=bound_pw,
                              dtype=jnp.float32)

    out = depthwise_separable_conv(x, w_dw, b_dw, w_pw, b_pw,
                                   stride=stride, padding=padding)
    out = jax.block_until_ready(out)

    # Reference: depthwise (groups=Cin) then pointwise 1x1 via XLA convs.
    ref_dw = jax.lax.conv_general_dilated(
        x, w_dw,
        window_strides=(stride, stride),
        padding=((padding, padding), (padding, padding)),
        dimension_numbers=("NCHW", "OIHW", "NCHW"),
        feature_group_count=Cin,
    ) + b_dw.reshape(1, Cin, 1, 1)
    ref = jax.lax.conv_general_dilated(
        ref_dw, w_pw,
        window_strides=(1, 1),
        padding="VALID",
        dimension_numbers=("NCHW", "OIHW", "NCHW"),
    ) + b_pw.reshape(1, Cout, 1, 1)
    ref = jax.block_until_ready(ref)

    assert out.shape == ref.shape == (N, Cout, H, W)
    assert jnp.allclose(out, ref, atol=1e-4, rtol=1e-4)

    print("KERNEL_OK")
</pallas_src>

<mosaic_0001>
module attributes {stable_mosaic.version = 11 : i64} {
  func.func @_dwsep_conv_kernel(%arg0: i32, %arg1: i32, %arg2: memref<1x18x18x4xf32, #tpu.memory_space<vmem>>, %arg3: memref<9x4xf32, #tpu.memory_space<vmem>>, %arg4: memref<4x8xf32, #tpu.memory_space<vmem>>, %arg5: memref<1x8xf32, #tpu.memory_space<vmem>>, %arg6: memref<1x128x8xf32, #tpu.memory_space<vmem>>) attributes {dimension_semantics = [#tpu.dimension_semantics<parallel>, #tpu.dimension_semantics<parallel>], iteration_bounds = array<i64: 2, 2>, scalar_prefetch = 0 : i64, scratch_operands = 0 : i64, tpu.core_type = #tpu.core_type<tc>, window_params = [{transform_indices = @transform_0, window_bounds = array<i64: 1, 18, 18, 4>}, {pipeline_mode = #tpu.pipeline_mode<synchronous>, transform_indices = @transform_1, window_bounds = array<i64: 9, 4>}, {pipeline_mode = #tpu.pipeline_mode<synchronous>, transform_indices = @transform_2, window_bounds = array<i64: 4, 8>}, {pipeline_mode = #tpu.pipeline_mode<synchronous>, transform_indices = @transform_3, window_bounds = array<i64: 1, 8>}, {transform_indices = @transform_4, window_bounds = array<i64: 1, 128, 8>}]} {
    %c8_i32 = arith.constant 8 : i32
    %0 = arith.muli %arg1, %c8_i32 : i32
    %1 = tpu.assume_multiple %0, 8 : i32
    %c0 = arith.constant 0 : index
    %2 = arith.index_cast %1 : i32 to index
    %c0_0 = arith.constant 0 : index
    %c0_1 = arith.constant 0 : index
    %3 = vector.load %arg2[%c0, %2, %c0_0, %c0_1] : memref<1x18x18x4xf32, #tpu.memory_space<vmem>>, vector<1x10x18x4xf32>
    %4 = vector.shape_cast %3 : vector<1x10x18x4xf32> to vector<10x18x4xf32>
    %c0_2 = arith.constant 0 : index
    %c0_3 = arith.constant 0 : index
    %5 = vector.load %arg3[%c0_2, %c0_3] : memref<9x4xf32, #tpu.memory_space<vmem>>, vector<9x4xf32>
    %cst = arith.constant 0.000000e+00 : f32
    %6 = vector.broadcast %cst : f32 to vector<8x16x4xf32>
    %7 = vector.extract_strided_slice %4 {offsets = [0, 0, 0], sizes = [8, 16, 4], strides = [1, 1, 1]} : vector<10x18x4xf32> to vector<8x16x4xf32>
    %8 = vector.extract_strided_slice %5 {offsets = [0, 0], sizes = [1, 4], strides = [1, 1]} : vector<9x4xf32> to vector<1x4xf32>
    %9 = vector.shape_cast %8 : vector<1x4xf32> to vector<4xf32>
    %10 = vector.shape_cast %9 : vector<4xf32> to vector<1x1x4xf32>
    %11 = vector.broadcast %10 : vector<1x1x4xf32> to vector<8x16x4xf32>
    %12 = arith.mulf %7, %11 : vector<8x16x4xf32>
    %13 = arith.addf %6, %12 : vector<8x16x4xf32>
    %14 = vector.extract_strided_slice %4 {offsets = [0, 1, 0], sizes = [8, 16, 4], strides = [1, 1, 1]} : vector<10x18x4xf32> to vector<8x16x4xf32>
    %15 = vector.extract_strided_slice %5 {offsets = [1, 0], sizes = [1, 4], strides = [1, 1]} : vector<9x4xf32> to vector<1x4xf32>
    %16 = vector.shape_cast %15 : vector<1x4xf32> to vector<4xf32>
    %17 = vector.shape_cast %16 : vector<4xf32> to vector<1x1x4xf32>
    %18 = vector.broadcast %17 : vector<1x1x4xf32> to vector<8x16x4xf32>
    %19 = arith.mulf %14, %18 : vector<8x16x4xf32>
    %20 = arith.addf %13, %19 : vector<8x16x4xf32>
    %21 = vector.extract_strided_slice %4 {offsets = [0, 2, 0], sizes = [8, 16, 4], strides = [1, 1, 1]} : vector<10x18x4xf32> to vector<8x16x4xf32>
    %22 = vector.extract_strided_slice %5 {offsets = [2, 0], sizes = [1, 4], strides = [1, 1]} : vector<9x4xf32> to vector<1x4xf32>
    %23 = vector.shape_cast %22 : vector<1x4xf32> to vector<4xf32>
    %24 = vector.shape_cast %23 : vector<4xf32> to vector<1x1x4xf32>
    %25 = vector.broadcast %24 : vector<1x1x4xf32> to vector<8x16x4xf32>
    %26 = arith.mulf %21, %25 : vector<8x16x4xf32>
    %27 = arith.addf %20, %26 : vector<8x16x4xf32>
    %28 = vector.extract_strided_slice %4 {offsets = [1, 0, 0], sizes = [8, 16, 4], strides = [1, 1, 1]} : vector<10x18x4xf32> to vector<8x16x4xf32>
    %29 = vector.extract_strided_slice %5 {offsets = [3, 0], sizes = [1, 4], strides = [1, 1]} : vector<9x4xf32> to vector<1x4xf32>
    %30 = vector.shape_cast %29 : vector<1x4xf32> to vector<4xf32>
    %31 = vector.shape_cast %30 : vector<4xf32> to vector<1x1x4xf32>
    %32 = vector.broadcast %31 : vector<1x1x4xf32> to vector<8x16x4xf32>
    %33 = arith.mulf %28, %32 : vector<8x16x4xf32>
    %34 = arith.addf %27, %33 : vector<8x16x4xf32>
    %35 = vector.extract_strided_slice %4 {offsets = [1, 1, 0], sizes = [8, 16, 4], strides = [1, 1, 1]} : vector<10x18x4xf32> to vector<8x16x4xf32>
    %36 = vector.extract_strided_slice %5 {offsets = [4, 0], sizes = [1, 4], strides = [1, 1]} : vector<9x4xf32> to vector<1x4xf32>
    %37 = vector.shape_cast %36 : vector<1x4xf32> to vector<4xf32>
    %38 = vector.shape_cast %37 : vector<4xf32> to vector<1x1x4xf32>
    %39 = vector.broadcast %38 : vector<1x1x4xf32> to vector<8x16x4xf32>
    %40 = arith.mulf %35, %39 : vector<8x16x4xf32>
    %41 = arith.addf %34, %40 : vector<8x16x4xf32>
    %42 = vector.extract_strided_slice %4 {offsets = [1, 2, 0], sizes = [8, 16, 4], strides = [1, 1, 1]} : vector<10x18x4xf32> to vector<8x16x4xf32>
    %43 = vector.extract_strided_slice %5 {offsets = [5, 0], sizes = [1, 4], strides = [1, 1]} : vector<9x4xf32> to vector<1x4xf32>
    %44 = vector.shape_cast %43 : vector<1x4xf32> to vector<4xf32>
    %45 = vector.shape_cast %44 : vector<4xf32> to vector<1x1x4xf32>
    %46 = vector.broadcast %45 : vector<1x1x4xf32> to vector<8x16x4xf32>
    %47 = arith.mulf %42, %46 : vector<8x16x4xf32>
    %48 = arith.addf %41, %47 : vector<8x16x4xf32>
    %49 = vector.extract_strided_slice %4 {offsets = [2, 0, 0], sizes = [8, 16, 4], strides = [1, 1, 1]} : vector<10x18x4xf32> to vector<8x16x4xf32>
    %50 = vector.extract_strided_slice %5 {offsets = [6, 0], sizes = [1, 4], strides = [1, 1]} : vector<9x4xf32> to vector<1x4xf32>
    %51 = vector.shape_cast %50 : vector<1x4xf32> to vector<4xf32>
    %52 = vector.shape_cast %51 : vector<4xf32> to vector<1x1x4xf32>
    %53 = vector.broadcast %52 : vector<1x1x4xf32> to vector<8x16x4xf32>
    %54 = arith.mulf %49, %53 : vector<8x16x4xf32>
    %55 = arith.addf %48, %54 : vector<8x16x4xf32>
    %56 = vector.extract_strided_slice %4 {offsets = [2, 1, 0], sizes = [8, 16, 4], strides = [1, 1, 1]} : vector<10x18x4xf32> to vector<8x16x4xf32>
    %57 = vector.extract_strided_slice %5 {offsets = [7, 0], sizes = [1, 4], strides = [1, 1]} : vector<9x4xf32> to vector<1x4xf32>
    %58 = vector.shape_cast %57 : vector<1x4xf32> to vector<4xf32>
    %59 = vector.shape_cast %58 : vector<4xf32> to vector<1x1x4xf32>
    %60 = vector.broadcast %59 : vector<1x1x4xf32> to vector<8x16x4xf32>
    %61 = arith.mulf %56, %60 : vector<8x16x4xf32>
    %62 = arith.addf %55, %61 : vector<8x16x4xf32>
    %63 = vector.extract_strided_slice %4 {offsets = [2, 2, 0], sizes = [8, 16, 4], strides = [1, 1, 1]} : vector<10x18x4xf32> to vector<8x16x4xf32>
    %64 = vector.extract_strided_slice %5 {offsets = [8, 0], sizes = [1, 4], strides = [1, 1]} : vector<9x4xf32> to vector<1x4xf32>
    %65 = vector.shape_cast %64 : vector<1x4xf32> to vector<4xf32>
    %66 = vector.shape_cast %65 : vector<4xf32> to vector<1x1x4xf32>
    %67 = vector.broadcast %66 : vector<1x1x4xf32> to vector<8x16x4xf32>
    %68 = arith.mulf %63, %67 : vector<8x16x4xf32>
    %69 = arith.addf %62, %68 : vector<8x16x4xf32>
    %70 = vector.shape_cast %69 : vector<8x16x4xf32> to vector<128x4xf32>
    %c0_4 = arith.constant 0 : index
    %c0_5 = arith.constant 0 : index
    %71 = vector.load %arg4[%c0_4, %c0_5] : memref<4x8xf32, #tpu.memory_space<vmem>>, vector<4x8xf32>
    %cst_6 = arith.constant dense<0.000000e+00> : vector<128x8xf32>
    %72 = tpu.matmul %70, %71, %cst_6 {dimension_numbers = #tpu.dot_dimension_numbers<[1], [0], [0], [1], [0, 0, 1, 1], [], []>} : vector<128x4xf32>, vector<4x8xf32>, vector<128x8xf32> -> vector<128x8xf32>
    %c0_7 = arith.constant 0 : index
    %c0_8 = arith.constant 0 : index
    %73 = vector.load %arg5[%c0_7, %c0_8] : memref<1x8xf32, #tpu.memory_space<vmem>>, vector<1x8xf32>
    %74 = vector.broadcast %73 : vector<1x8xf32> to vector<128x8xf32>
    %75 = arith.addf %72, %74 : vector<128x8xf32>
    %c0_9 = arith.constant 0 : index
    %c0_10 = arith.constant 0 : index
    %c0_11 = arith.constant 0 : index
    %76 = vector.load %arg6[%c0_9, %c0_10, %c0_11] : memref<1x128x8xf32, #tpu.memory_space<vmem>>, vector<1x128x8xf32>
    %77 = vector.shape_cast %76 : vector<1x128x8xf32> to vector<128x8xf32>
    %78 = vector.shape_cast %75 : vector<128x8xf32> to vector<1x128x8xf32>
    tpu.vector_store %arg6[%c0_9, %c0_10, %c0_11], %78 {strides = array<i32>} : memref<1x128x8xf32, #tpu.memory_space<vmem>>, vector<1x128x8xf32>,
    return
  }
  func.func @transform_0(%arg0: i32, %arg1: i32) -> (i32, i32, i32, i32) {
    %c0_i32 = arith.constant 0 : i32
    %c0_i32_0 = arith.constant 0 : i32
    %c0_i32_1 = arith.constant 0 : i32
    %c0_i32_2 = arith.constant 0 : i32
    return %arg0, %c0_i32, %c0_i32_0, %c0_i32_1 : i32, i32, i32, i32
  }
  func.func @transform_1(%arg0: i32, %arg1: i32) -> (i32, i32) {
    %c0_i32 = arith.constant 0 : i32
    %c0_i32_0 = arith.constant 0 : i32
    %c0_i32_1 = arith.constant 0 : i32
    return %c0_i32, %c0_i32_0 : i32, i32
  }
  func.func @transform_2(%arg0: i32, %arg1: i32) -> (i32, i32) {
    %c0_i32 = arith.constant 0 : i32
    %c0_i32_0 = arith.constant 0 : i32
    %c0_i32_1 = arith.constant 0 : i32
    return %c0_i32, %c0_i32_0 : i32, i32
  }
  func.func @transform_3(%arg0: i32, %arg1: i32) -> (i32, i32) {
    %c0_i32 = arith.constant 0 : i32
    %c0_i32_0 = arith.constant 0 : i32
    %c0_i32_1 = arith.constant 0 : i32
    return %c0_i32, %c0_i32_0 : i32, i32
  }
  func.func @transform_4(%arg0: i32, %arg1: i32) -> (i32, i32, i32) {
    %c0_i32 = arith.constant 0 : i32
    %c0_i32_0 = arith.constant 0 : i32
    return %arg0, %arg1, %c0_i32 : i32, i32, i32
  }
}

</mosaic_0001>

<llo_original>
// kernel: tpu_custom_call.1
$region0: #{tpu_custom_call.1}
  #allocation0 [shape = 'u32[]', space=smem, size = 0x4, offset = 0x4, fixed_abs, tag = 'smem constant byte address 0x4 - core index']
  #allocation1 [shape = 'u32[144,128]{1,0:T(1,128)}', space=vmem, size = 0x12000, scoped, tag = 'internal scratch']
  %s0 = inlined_call_operand.vmem [shape: f32[2,18,18,4], index: 0, kind: input, shape index: {}]
  %s1 = inlined_call_operand.vmem [shape: f32[9,4], index: 1, kind: input, shape index: {}]
  %s2 = inlined_call_operand.vmem [shape: f32[4,8], index: 2, kind: input, shape index: {}]
  %s3 = inlined_call_operand.vmem [shape: f32[1,8], index: 3, kind: input, shape index: {}]
  %s4 = inlined_call_operand.vmem [shape: f32[2,256,8], index: 4, kind: output, shape index: {}]
  %s5 = sld [smem:[#allocation0]]
  $region49: #{tpu_custom_call.1} parent=0
    _
  %s7 = ssub.s32 1, %s5
  %s8 = scalar_select 0, %s7, %s5
  loop: start=0, step=1, limit=6
  $region2: #{tpu_custom_call.1} parent=0 // loop_pre_header
    _
  $region3: #{tpu_custom_call.1} parent=0 // loop_header
    %s10 = sphi 0, %s14
    %p11 = scmp.ge.s32.totalorder %s10, 6
    %s17 = sphi 0, %s29
    %s18 = sphi 0, %s25
    %s19 = sphi 0, %s17
    %s20 = sphi 0, %s18
    %s21 = sphi 0, %s19
    %s22 = sphi 0, %s20
    %s32 = sphi 0, %s34
    %s35 = sphi 0, %s32
    %s36 = sphi 0, %s35
    %s52 = sphi 0, %s36
    %s56 = sphi 0, %s56
    %s58 = sphi 0, %s56
    %s59 = sphi 0, %s58
    %s73 = sphi 0, %s59
    %s77 = sphi 0, %s77
    %s79 = sphi 0, %s77
    %s80 = sphi 0, %s79
    %s94 = sphi 0, %s80
    %s98 = sphi 0, %s98
    %s100 = sphi 0, %s98
    %s101 = sphi 0, %s100
    %s115 = sphi 0, %s101
    %s123 = sphi 0, %s125
    %s126 = sphi 0, %s123
    %s127 = sphi 0, %s126
    %s143 = sphi 0, %s127
  $region4: #{tpu_custom_call.1} parent=0 // loop_header_branch
    %13 = sbr.rel (%p11) target = $region8
  $region5: #{tpu_custom_call.1} parent=0 // loop_body
    %s15 = ssub.s32 %s10, 1
    %s16 = ssub.s32 %s10, 2
    %s23 = sadd.s32 1, %s18
    %p24 = scmp.ge.s32.totalorder %s23, 2
    %s25 = scalar_select %p24, 0, %s23
    %s26 = sadd.s32 1, %s17
    %s27 = scalar_select %p24, %s26, %s17
    %p28 = scmp.ge.s32.totalorder %s27, 2
    %s29 = scalar_select %p28, 0, %s27
    %s30 = ssub.s32 %s17, %s29
    %p31 = scmp.eq.s32.totalorder %s30, 0
    %s33 = sadd.s32 %s32, 1
    %s34 = scalar_select %p31, %s32, %s33
    %p37 = pneg %p31
    %p38 = scmp.eq.s32.totalorder %s10, 3
    %p39 = por %p37, %p38
    %p40 = scmp.ne.s32.totalorder %s32, %s35
    %p41 = scmp.eq.s32.totalorder %s10, 0
    %p42 = por %p40, %p41
    %p43 = scmp.ne.s32.totalorder %s32, %s35
    %p44 = scmp.eq.s32.totalorder %s15, 3
    %p45 = por %p43, %p44
    %p46 = scmp.ne.s32.totalorder %s35, %s36
    %p47 = scmp.eq.s32.totalorder %s15, 0
    %p48 = por %p46, %p47
    %p49 = scmp.ne.s32.totalorder %s35, %s36
    %p50 = scmp.eq.s32.totalorder %s16, 3
    %p51 = por %p49, %p50
    %p53 = scmp.ne.s32.totalorder %s36, %s52
    %p54 = scmp.eq.s32.totalorder %s16, 0
    %p55 = por %p53, %p54
    %s57 = sadd.s32 %s56, 1
    %p60 = scmp.eq.s32.totalorder %s10, 3
    %p61 = scmp.ne.s32.totalorder %s56, %s58
    %p62 = scmp.eq.s32.totalorder %s10, 0
    %p63 = por %p61, %p62
    %p64 = scmp.ne.s32.totalorder %s56, %s58
    %p65 = scmp.eq.s32.totalorder %s15, 3
    %p66 = por %p64, %p65
    %p67 = scmp.ne.s32.totalorder %s58, %s59
    %p68 = scmp.eq.s32.totalorder %s15, 0
    %p69 = por %p67, %p68
    %p70 = scmp.ne.s32.totalorder %s58, %s59
    %p71 = scmp.eq.s32.totalorder %s16, 3
    %p72 = por %p70, %p71
    %p74 = scmp.ne.s32.totalorder %s59, %s73
    %p75 = scmp.eq.s32.totalorder %s16, 0
    %p76 = por %p74, %p75
    %s78 = sadd.s32 %s77, 1
    %p81 = scmp.eq.s32.totalorder %s10, 3
    %p82 = scmp.ne.s32.totalorder %s77, %s79
    %p83 = scmp.eq.s32.totalorder %s10, 0
    %p84 = por %p82, %p83
    %p85 = scmp.ne.s32.totalorder %s77, %s79
    %p86 = scmp.eq.s32.totalorder %s15, 3
    %p87 = por %p85, %p86
    %p88 = scmp.ne.s32.totalorder %s79, %s80
    %p89 = scmp.eq.s32.totalorder %s15, 0
    %p90 = por %p88, %p89
    %p91 = scmp.ne.s32.totalorder %s79, %s80
    %p92 = scmp.eq.s32.totalorder %s16, 3
    %p93 = por %p91, %p92
    %p95 = scmp.ne.s32.totalorder %s80, %s94
    %p96 = scmp.eq.s32.totalorder %s16, 0
    %p97 = por %p95, %p96
    %s99 = sadd.s32 %s98, 1
    %p102 = scmp.eq.s32.totalorder %s10, 3
    %p103 = scmp.ne.s32.totalorder %s98, %s100
    %p104 = scmp.eq.s32.totalorder %s10, 0
    %p105 = por %p103, %p104
    %p106 = scmp.ne.s32.totalorder %s98, %s100
    %p107 = scmp.eq.s32.totalorder %s15, 3
    %p108 = por %p106, %p107
    %p109 = scmp.ne.s32.totalorder %s100, %s101
    %p110 = scmp.eq.s32.totalorder %s15, 0
    %p111 = por %p109, %p110
    %p112 = scmp.ne.s32.totalorder %s100, %s101
    %p113 = scmp.eq.s32.totalorder %s16, 3
    %p114 = por %p112, %p113
    %p116 = scmp.ne.s32.totalorder %s101, %s115
    %p117 = scmp.eq.s32.totalorder %s16, 0
    %p118 = por %p116, %p117
    %s119 = ssub.s32 %s17, %s29
    %s120 = ssub.s32 %s18, %s25
    %s121 = sor.u32 %s119, %s120
    %p122 = scmp.eq.s32.totalorder %s121, 0
    %s124 = sadd.s32 %s123, 1
    %s125 = scalar_select %p122, %s123, %s124
    %p128 = pneg %p122
    %p129 = scmp.eq.s32.totalorder %s10, 3
    %p130 = por %p128, %p129
    %p131 = scmp.ne.s32.totalorder %s123, %s126
    %p132 = scmp.eq.s32.totalorder %s10, 0
    %p133 = por %p131, %p132
    %p134 = scmp.ne.s32.totalorder %s123, %s126
    %p135 = scmp.eq.s32.totalorder %s15, 3
    %p136 = por %p134, %p135
    %p137 = scmp.ne.s32.totalorder %s126, %s127
    %p138 = scmp.eq.s32.totalorder %s15, 0
    %p139 = por %p137, %p138
    %p140 = scmp.ne.s32.totalorder %s126, %s127
    %p141 = scmp.eq.s32.totalorder %s16, 3
    %p142 = por %p140, %p141
    %p144 = scmp.ne.s32.totalorder %s127, %s143
    %p145 = scmp.eq.s32.totalorder %s16, 0
    %p146 = por %p144, %p145
    %p147 = scmp.le.s32.totalorder 1, %s10
    %p148 = scmp.lt.s32.totalorder %s10, 5
    %p149 = pnand %p147, %p148
    %p150 = pneg %p149
    // Predicated region
    $region9: #{tpu_custom_call.1} parent=5 // pred_check
      _
    $region10: #{tpu_custom_call.1} parent=5 // pred_check_branch
      %152 = sbr.rel (%p149) target = $region12
    $region11: #{tpu_custom_call.1} parent=5 // pred_region
      %s153 = ssub.s32 %s10, 1
      // Predicated region
      $region13: #{tpu_custom_call.1} parent=11 // pred_check
        %p154 = pneg %p69
      $region14: #{tpu_custom_call.1} parent=11 // pred_check_branch
        %156 = sbr.rel (%p154) target = $region16
      $region15: #{tpu_custom_call.1} parent=11 // pred_region
        _
      $region16: #{tpu_custom_call.1} parent=11 // pred_fallthru
        _
      // Predicated region
      $region17: #{tpu_custom_call.1} parent=11 // pred_check
        %p157 = pneg %p90
      $region18: #{tpu_custom_call.1} parent=11 // pred_check_branch
        %159 = sbr.rel (%p157) target = $region20
      $region19: #{tpu_custom_call.1} parent=11 // pred_region
        _
      $region20: #{tpu_custom_call.1} parent=11 // pred_fallthru
        _
      // Predicated region
      $region21: #{tpu_custom_call.1} parent=11 // pred_check
        %p160 = pneg %p111
      $region22: #{tpu_custom_call.1} parent=11 // pred_check_branch
        %162 = sbr.rel (%p160) target = $region24
      $region23: #{tpu_custom_call.1} parent=11 // pred_region
        _
      $region24: #{tpu_custom_call.1} parent=11 // pred_fallthru
        _
    $region12: #{tpu_custom_call.1} parent=5 // pred_fallthru
      _
    %p163 = scmp.lt.s32.totalorder %s10, 4
    // Predicated region
    $region25: #{tpu_custom_call.1} parent=5 // pred_check
      %p164 = pneg %p163
    $region26: #{tpu_custom_call.1} parent=5 // pred_check_branch
      %166 = sbr.rel (%p164) target = $region28
    $region27: #{tpu_custom_call.1} parent=5 // pred_region
      // Predicated region
      $region29: #{tpu_custom_call.1} parent=27 // pred_check
        %p167 = pneg %p42
      $region30: #{tpu_custom_call.1} parent=27 // pred_check_branch
        %169 = sbr.rel (%p167) target = $region32
      $region31: #{tpu_custom_call.1} parent=27 // pred_region
        %p170 = scmp.lt.s32.totalorder %s17, 1
        %s171 = scalar_select %p170, %s17, 1
        %s172 = smul.addr %s171, 54
        %s173 = smul.addr %s172, 8
        %s174 = scalar_lea.vmem %s0, %s173
      $region32: #{tpu_custom_call.1} parent=27 // pred_fallthru
        _
    $region28: #{tpu_custom_call.1} parent=5 // pred_fallthru
      _
    %p175 = scmp.le.s32.totalorder 1, %s10
    %p176 = scmp.lt.s32.totalorder %s10, 5
    %p177 = pnand %p175, %p176
    %p178 = pneg %p177
    // Predicated region
    $region33: #{tpu_custom_call.1} parent=5 // pred_check
      _
    $region34: #{tpu_custom_call.1} parent=5 // pred_check_branch
      %180 = sbr.rel (%p177) target = $region36
    $region35: #{tpu_custom_call.1} parent=5 // pred_region
      %s181 = ssub.s32 %s10, 1
      %p182 = scmp.lt.s32.totalorder %s19, 1
      %s183 = scalar_select %p182, %s19, 1
      %s184 = smul.addr %s183, 54
      %s185 = smul.addr %s184, 8
      %s186 = scalar_lea.vmem %s0, %s185
      %p187 = pneg %p48
      %p188 = pneg %p45
      %p189 = pneg %p69
      %p190 = pneg %p66
      %p191 = pneg %p90
      %p192 = pneg %p87
      %p193 = pneg %p111
      %p194 = pneg %p108
      %p195 = pneg %p139
      %p196 = pneg %p136
      %s197 = smul.u32 16, %s20
      %p198 = scmp.lt.s32.totalorder %s19, 1
      %s199 = scalar_select %p198, %s19, 1
      %p200 = scmp.lt.s32.totalorder %s197, 31
      %s201 = scalar_select %p200, %s197, 31
      %s202 = smul.addr %s199, 32
      %s203 = sadd.s32 %s201, %s202
      %s204 = smul.addr %s203, 8
      %s205 = scalar_lea.vmem %s4, %s204
      %p206 = scmp.lt.s32.totalorder %s19, 1
      %s207 = scalar_select %p206, %s19, 1
      %s208 = smul.addr %s207, 54
      %s209 = smul.addr %s208, 8
      %s210 = scalar_lea.vmem %s0, %s209
      %s211 = smul.u32 16, %s20
      %p212 = scmp.lt.s32.totalorder %s19, 1
      %s213 = scalar_select %p212, %s19, 1
      %p214 = scmp.lt.s32.totalorder %s211, 31
      %s215 = scalar_select %p214, %s211, 31
      %s216 = smul.addr %s213, 32
      %s217 = sadd.s32 %s215, %s216
      %s218 = smul.addr %s217, 8
      %s219 = scalar_lea.vmem %s4, %s218
      %s220 = smul.u32 16, %s20
      %s221 = smul.u32 %s20, 8
      %s222 = smul.u32 %s221, 24
      %s223 = scalar_lea.vmem %s210, %s222
      %v224 = vld [vmem:[%s223] sm:$0xff]
      %v225 = vld [vmem:[%s223 + $0x8] sm:$0xff]
      %v226 = vld [vmem:[%s223 + $0x10] sm:$0x3]
      %v227 = vld [vmem:[%s223 + $0x18] sm:$0xff]
      %v228 = vld [vmem:[%s223 + $0x20] sm:$0xff]
      %v229 = vld [vmem:[%s223 + $0x28] sm:$0x3]
      %v230 = vld [vmem:[%s223 + $0x30] sm:$0xff]
      %v231 = vld [vmem:[%s223 + $0x38] sm:$0xff]
      %v232 = vld [vmem:[%s223 + $0x40] sm:$0x3]
      %v233 = vld [vmem:[%s223 + $0x48] sm:$0xff]
      %v234 = vld [vmem:[%s223 + $0x50] sm:$0xff]
      %v235 = vld [vmem:[%s223 + $0x58] sm:$0x3]
      %v236 = vld [vmem:[%s223 + $0x60] sm:$0xff]
      %v237 = vld [vmem:[%s223 + $0x68] sm:$0xff]
      %v238 = vld [vmem:[%s223 + $0x70] sm:$0x3]
      %v239 = vld [vmem:[%s223 + $0x78] sm:$0xff]
      %v240 = vld [vmem:[%s223 + $0x80] sm:$0xff]
      %v241 = vld [vmem:[%s223 + $0x88] sm:$0x3]
      %v242 = vld [vmem:[%s223 + $0x90] sm:$0xff]
      %v243 = vld [vmem:[%s223 + $0x98] sm:$0xff]
      %v244 = vld [vmem:[%s223 + $0xa0] sm:$0x3]
      %v245 = vld [vmem:[%s223 + $0xa8] sm:$0xff]
      %v246 = vld [vmem:[%s223 + $0xb0] sm:$0xff]
      %v247 = vld [vmem:[%s223 + $0xb8] sm:$0x3]
      %v248 = vld [vmem:[%s223 + $0xc0] sm:$0xff]
      %v249 = vld [vmem:[%s223 + $0xc8] sm:$0xff]
      %v250 = vld [vmem:[%s223 + $0xd0] sm:$0x3]
      %v251 = vld [vmem:[%s223 + $0xd8] sm:$0xff]
      %v252 = vld [vmem:[%s223 + $0xe0] sm:$0xff]
      %v253 = vld [vmem:[%s223 + $0xe8] sm:$0x3]
      %v254 = vld [vmem:[%s1] sm:$0xff]
      %v255 = vld [vmem:[%s1 + $0x8] sm:$0x1]
      %v256 = vlaneseq
      %v257 = vshrl.u32 %v256, 7
      %v258 = vsub.s32 0, %v257
      %v259 = vrot.slane %v254, %v258
      %v260 = vmul.f32 %v224, %v259
      %v261 = vmul.f32 %v225, %v259
      %v262 = vmul.f32 %v227, %v259
      %v263 = vmul.f32 %v228, %v259
      %v264 = vmul.f32 %v230, %v259
      %v265 = vmul.f32 %v231, %v259
      %v266 = vmul.f32 %v233, %v259
      %v267 = vmul.f32 %v234, %v259
      %v268 = vmul.f32 %v236, %v259
      %v269 = vmul.f32 %v237, %v259
      %v270 = vmul.f32 %v239, %v259
      %v271 = vmul.f32 %v240, %v259
      %v272 = vmul.f32 %v242, %v259
      %v273 = vmul.f32 %v243, %v259
      %v274 = vmul.f32 %v245, %v259
      %v275 = vmul.f32 %v246, %v259
      %v276 = vadd.f32 %v260, 0.0
      %v277 = vadd.f32 %v261, 0.0
      %v278 = vadd.f32 %v262, 0.0
      %v279 = vadd.f32 %v263, 0.0
      %v280 = vadd.f32 %v264, 0.0
      %v281 = vadd.f32 %v265, 0.0
      %v282 = vadd.f32 %v266, 0.0
      %v283 = vadd.f32 %v267, 0.0
      %v284 = vadd.f32 %v268, 0.0
      %v285 = vadd.f32 %v269, 0.0
      %v286 = vadd.f32 %v270, 0.0
      %v287 = vadd.f32 %v271, 0.0
      %v288 = vadd.f32 %v272, 0.0
      %v289 = vadd.f32 %v273, 0.0
      %v290 = vadd.f32 %v274, 0.0
      %v291 = vadd.f32 %v275, 0.0
      %v292 = vlaneseq
      %v293 = vshrl.u32 %v292, 7
      %v294 = vsub.s32 1, %v293
      %v295 = vrot.slane %v254, %v294
      %v296 = vmul.f32 %v224, %v295
      %v297 = vmul.f32 %v225, %v295
      %v298 = vmul.f32 %v226, %v295
      %v299 = vmul.f32 %v227, %v295
      %v300 = vmul.f32 %v228, %v295
      %v301 = vmul.f32 %v229, %v295
      %v302 = vmul.f32 %v230, %v295
      %v303 = vmul.f32 %v231, %v295
      %v304 = vmul.f32 %v232, %v295
      %v305 = vmul.f32 %v233, %v295
      %v306 = vmul.f32 %v234, %v295
      %v307 = vmul.f32 %v235, %v295
      %v308 = vmul.f32 %v236, %v295
      %v309 = vmul.f32 %v237, %v295
      %v310 = vmul.f32 %v238, %v295
      %v311 = vmul.f32 %v239, %v295
      %v312 = vmul.f32 %v240, %v295
      %v313 = vmul.f32 %v241, %v295
      %v314 = vmul.f32 %v242, %v295
      %v315 = vmul.f32 %v243, %v295
      %v316 = vmul.f32 %v244, %v295
      %v317 = vmul.f32 %v245, %v295
      %v318 = vmul.f32 %v246, %v295
      %v319 = vmul.f32 %v247, %v295
      %vm344 = vcmask 1046528
      %v345 = vrot.slane %v296, 1
      %v346 = vrot.slane %v297, 1
      %v347 = vsel %vm344, %v345, %v346
      %v348 = vrot.slane %v298, 1
      %v349 = vsel %vm344, %v346, %v348
      %v350 = vrot.slane %v299, 1
      %v351 = vrot.slane %v300, 1
      %v352 = vsel %vm344, %v350, %v351
      %v353 = vrot.slane %v301, 1
      %v354 = vsel %vm344, %v351, %v353
      %v355 = vrot.slane %v302, 1
      %v356 = vrot.slane %v303, 1
      %v357 = vsel %vm344, %v355, %v356
      %v358 = vrot.slane %v304, 1
      %v359 = vsel %vm344, %v356, %v358
      %v360 = vrot.slane %v305, 1
      %v361 = vrot.slane %v306, 1
      %v362 = vsel %vm344, %v360, %v361
      %v363 = vrot.slane %v307, 1
      %v364 = vsel %vm344, %v361, %v363
      %v365 = vrot.slane %v308, 1
      %v366 = vrot.slane %v309, 1
      %v367 = vsel %vm344, %v365, %v366
      %v368 = vrot.slane %v310, 1
      %v369 = vsel %vm344, %v366, %v368
      %v370 = vrot.slane %v311, 1
      %v371 = vrot.slane %v312, 1
      %v372 = vsel %vm344, %v370, %v371
      %v373 = vrot.slane %v313, 1
      %v374 = vsel %vm344, %v371, %v373
      %v375 = vrot.slane %v314, 1
      %v376 = vrot.slane %v315, 1
      %v377 = vsel %vm344, %v375, %v376
      %v378 = vrot.slane %v316, 1
      %v379 = vsel %vm344, %v376, %v378
      %v380 = vrot.slane %v317, 1
      %v381 = vrot.slane %v318, 1
      %v382 = vsel %vm344, %v380, %v381
      %v383 = vrot.slane %v319, 1
      %v384 = vsel %vm344, %v381, %v383
      %v401 = vadd.f32 %v276, %v347
      %v402 = vadd.f32 %v277, %v349
      %v403 = vadd.f32 %v278, %v352
      %v404 = vadd.f32 %v279, %v354
      %v405 = vadd.f32 %v280, %v357
      %v406 = vadd.f32 %v281, %v359
      %v407 = vadd.f32 %v282, %v362
      %v408 = vadd.f32 %v283, %v364
      %v409 = vadd.f32 %v284, %v367
      %v410 = vadd.f32 %v285, %v369
      %v411 = vadd.f32 %v286, %v372
      %v412 = vadd.f32 %v287, %v374
      %v413 = vadd.f32 %v288, %v377
      %v414 = vadd.f32 %v289, %v379
      %v415 = vadd.f32 %v290, %v382
      %v416 = vadd.f32 %v291, %v384
      %v417 = vlaneseq
      %v418 = vshrl.u32 %v417, 7
      %v419 = vsub.s32 2, %v418
      %v420 = vrot.slane %v254, %v419
      %v421 = vmul.f32 %v224, %v420
      %v422 = vmul.f32 %v225, %v420
      %v423 = vmul.f32 %v226, %v420
      %v424 = vmul.f32 %v227, %v420
      %v425 = vmul.f32 %v228, %v420
      %v426 = vmul.f32 %v229, %v420
      %v427 = vmul.f32 %v230, %v420
      %v428 = vmul.f32 %v231, %v420
      %v429 = vmul.f32 %v232, %v420
      %v430 = vmul.f32 %v233, %v420
      %v431 = vmul.f32 %v234, %v420
      %v432 = vmul.f32 %v235, %v420
      %v433 = vmul.f32 %v236, %v420
      %v434 = vmul.f32 %v237, %v420
      %v435 = vmul.f32 %v238, %v420
      %v436 = vmul.f32 %v239, %v420
      %v437 = vmul.f32 %v240, %v420
      %v438 = vmul.f32 %v241, %v420
      %v439 = vmul.f32 %v242, %v420
      %v440 = vmul.f32 %v243, %v420
      %v441 = vmul.f32 %v244, %v420
      %v442 = vmul.f32 %v245, %v420
      %v443 = vmul.f32 %v246, %v420
      %v444 = vmul.f32 %v247, %v420
      %vm469 = vcmask 1045504
      %v470 = vrot.slane %v421, 2
      %v471 = vrot.slane %v422, 2
      %v472 = vsel %vm469, %v470, %v471
      %v473 = vrot.slane %v423, 2
      %v474 = vsel %vm469, %v471, %v473
      %v475 = vrot.slane %v424, 2
      %v476 = vrot.slane %v425, 2
      %v477 = vsel %vm469, %v475, %v476
      %v478 = vrot.slane %v426, 2
      %v479 = vsel %vm469, %v476, %v478
      %v480 = vrot.slane %v427, 2
      %v481 = vrot.slane %v428, 2
      %v482 = vsel %vm469, %v480, %v481
      %v483 = vrot.slane %v429, 2
      %v484 = vsel %vm469, %v481, %v483
      %v485 = vrot.slane %v430, 2
      %v486 = vrot.slane %v431, 2
      %v487 = vsel %vm469, %v485, %v486
      %v488 = vrot.slane %v432, 2
      %v489 = vsel %vm469, %v486, %v488
      %v490 = vrot.slane %v433, 2
      %v491 = vrot.slane %v434, 2
      %v492 = vsel %vm469, %v490, %v491
      %v493 = vrot.slane %v435, 2
      %v494 = vsel %vm469, %v491, %v493
      %v495 = vrot.slane %v436, 2
      %v496 = vrot.slane %v437, 2
      %v497 = vsel %vm469, %v495, %v496
      %v498 = vrot.slane %v438, 2
      %v499 = vsel %vm469, %v496, %v498
      %v500 = vrot.slane %v439, 2
      %v501 = vrot.slane %v440, 2
      %v502 = vsel %vm469, %v500, %v501
      %v503 = vrot.slane %v441, 2
      %v504 = vsel %vm469, %v501, %v503
      %v505 = vrot.slane %v442, 2
      %v506 = vrot.slane %v443, 2
      %v507 = vsel %vm469, %v505, %v506
      %v508 = vrot.slane %v444, 2
      %v509 = vsel %vm469, %v506, %v508
      %v526 = vadd.f32 %v401, %v472
      %v527 = vadd.f32 %v402, %v474
      %v528 = vadd.f32 %v403, %v477
      %v529 = vadd.f32 %v404, %v479
      %v530 = vadd.f32 %v405, %v482
      %v531 = vadd.f32 %v406, %v484
      %v532 = vadd.f32 %v407, %v487
      %v533 = vadd.f32 %v408, %v489
      %v534 = vadd.f32 %v409, %v492
      %v535 = vadd.f32 %v410, %v494
      %v536 = vadd.f32 %v411, %v497
      %v537 = vadd.f32 %v412, %v499
      %v538 = vadd.f32 %v413, %v502
      %v539 = vadd.f32 %v414, %v504
      %v540 = vadd.f32 %v415, %v507
      %v541 = vadd.f32 %v416, %v509
      %v542 = vlaneseq
      %v543 = vshrl.u32 %v542, 7
      %v544 = vsub.s32 3, %v543
      %v545 = vrot.slane %v254, %v544
      %v546 = vmul.f32 %v227, %v545
      %v547 = vmul.f32 %v228, %v545
      %v548 = vmul.f32 %v230, %v545
      %v549 = vmul.f32 %v231, %v545
      %v550 = vmul.f32 %v233, %v545
      %v551 = vmul.f32 %v234, %v545
      %v552 = vmul.f32 %v236, %v545
      %v553 = vmul.f32 %v237, %v545
      %v554 = vmul.f32 %v239, %v545
      %v555 = vmul.f32 %v240, %v545
      %v556 = vmul.f32 %v242, %v545
      %v557 = vmul.f32 %v243, %v545
      %v558 = vmul.f32 %v245, %v545
      %v559 = vmul.f32 %v246, %v545
      %v560 = vmul.f32 %v248, %v545
      %v561 = vmul.f32 %v249, %v545
      %v562 = vadd.f32 %v526, %v546
      %v563 = vadd.f32 %v527, %v547
      %v564 = vadd.f32 %v528, %v548
      %v565 = vadd.f32 %v529, %v549
      %v566 = vadd.f32 %v530, %v550
      %v567 = vadd.f32 %v531, %v551
      %v568 = vadd.f32 %v532, %v552
      %v569 = vadd.f32 %v533, %v553
      %v570 = vadd.f32 %v534, %v554
      %v571 = vadd.f32 %v535, %v555
      %v572 = vadd.f32 %v536, %v556
      %v573 = vadd.f32 %v537, %v557
      %v574 = vadd.f32 %v538, %v558
      %v575 = vadd.f32 %v539, %v559
      %v576 = vadd.f32 %v540, %v560
      %v577 = vadd.f32 %v541, %v561
      %v578 = vlaneseq
      %v579 = vshrl.u32 %v578, 7
      %v580 = vsub.s32 4, %v579
      %v581 = vrot.slane %v254, %v580
      %v582 = vmul.f32 %v227, %v581
      %v583 = vmul.f32 %v228, %v581
      %v584 = vmul.f32 %v229, %v581
      %v585 = vmul.f32 %v230, %v581
      %v586 = vmul.f32 %v231, %v581
      %v587 = vmul.f32 %v232, %v581
      %v588 = vmul.f32 %v233, %v581
      %v589 = vmul.f32 %v234, %v581
      %v590 = vmul.f32 %v235, %v581
      %v591 = vmul.f32 %v236, %v581
      %v592 = vmul.f32 %v237, %v581
      %v593 = vmul.f32 %v238, %v581
      %v594 = vmul.f32 %v239, %v581
      %v595 = vmul.f32 %v240, %v581
      %v596 = vmul.f32 %v241, %v581
      %v597 = vmul.f32 %v242, %v581
      %v598 = vmul.f32 %v243, %v581
      %v599 = vmul.f32 %v244, %v581
      %v600 = vmul.f32 %v245, %v581
      %v601 = vmul.f32 %v246, %v581
      %v602 = vmul.f32 %v247, %v581
      %v603 = vmul.f32 %v248, %v581
      %v604 = vmul.f32 %v249, %v581
      %v605 = vmul.f32 %v250, %v581
      %v630 = vrot.slane %v582, 1
      %v631 = vrot.slane %v583, 1
      %v632 = vsel %vm344, %v630, %v631
      %v633 = vrot.slane %v584, 1
      %v634 = vsel %vm344, %v631, %v633
      %v635 = vrot.slane %v585, 1
      %v636 = vrot.slane %v586, 1
      %v637 = vsel %vm344, %v635, %v636
      %v638 = vrot.slane %v587, 1
      %v639 = vsel %vm344, %v636, %v638
      %v640 = vrot.slane %v588, 1
      %v641 = vrot.slane %v589, 1
      %v642 = vsel %vm344, %v640, %v641
      %v643 = vrot.slane %v590, 1
      %v644 = vsel %vm344, %v641, %v643
      %v645 = vrot.slane %v591, 1
      %v646 = vrot.slane %v592, 1
      %v647 = vsel %vm344, %v645, %v646
      %v648 = vrot.slane %v593, 1
      %v649 = vsel %vm344, %v646, %v648
      %v650 = vrot.slane %v594, 1
      %v651 = vrot.slane %v595, 1
      %v652 = vsel %vm344, %v650, %v651
      %v653 = vrot.slane %v596, 1
      %v654 = vsel %vm344, %v651, %v653
      %v655 = vrot.slane %v597, 1
      %v656 = vrot.slane %v598, 1
      %v657 = vsel %vm344, %v655, %v656
      %v658 = vrot.slane %v599, 1
      %v659 = vsel %vm344, %v656, %v658
      %v660 = vrot.slane %v600, 1
      %v661 = vrot.slane %v601, 1
      %v662 = vsel %vm344, %v660, %v661
      %v663 = vrot.slane %v602, 1
      %v664 = vsel %vm344, %v661, %v663
      %v665 = vrot.slane %v603, 1
      %v666 = vrot.slane %v604, 1
      %v667 = vsel %vm344, %v665, %v666
      %v668 = vrot.slane %v605, 1
      %v669 = vsel %vm344, %v666, %v668
      %v686 = vadd.f32 %v562, %v632
      %v687 = vadd.f32 %v563, %v634
      %v688 = vadd.f32 %v564, %v637
      %v689 = vadd.f32 %v565, %v639
      %v690 = vadd.f32 %v566, %v642
      %v691 = vadd.f32 %v567, %v644
      %v692 = vadd.f32 %v568, %v647
      %v693 = vadd.f32 %v569, %v649
      %v694 = vadd.f32 %v570, %v652
      %v695 = vadd.f32 %v571, %v654
      %v696 = vadd.f32 %v572, %v657
      %v697 = vadd.f32 %v573, %v659
      %v698 = vadd.f32 %v574, %v662
      %v699 = vadd.f32 %v575, %v664
      %v700 = vadd.f32 %v576, %v667
      %v701 = vadd.f32 %v577, %v669
      %v702 = vlaneseq
      %v703 = vshrl.u32 %v702, 7
      %v704 = vsub.s32 5, %v703
      %v705 = vrot.slane %v254, %v704
      %v706 = vmul.f32 %v227, %v705
      %v707 = vmul.f32 %v228, %v705
      %v708 = vmul.f32 %v229, %v705
      %v709 = vmul.f32 %v230, %v705
      %v710 = vmul.f32 %v231, %v705
      %v711 = vmul.f32 %v232, %v705
      %v712 = vmul.f32 %v233, %v705
      %v713 = vmul.f32 %v234, %v705
      %v714 = vmul.f32 %v235, %v705
      %v715 = vmul.f32 %v236, %v705
      %v716 = vmul.f32 %v237, %v705
      %v717 = vmul.f32 %v238, %v705
      %v718 = vmul.f32 %v239, %v705
      %v719 = vmul.f32 %v240, %v705
      %v720 = vmul.f32 %v241, %v705
      %v721 = vmul.f32 %v242, %v705
      %v722 = vmul.f32 %v243, %v705
      %v723 = vmul.f32 %v244, %v705
      %v724 = vmul.f32 %v245, %v705
      %v725 = vmul.f32 %v246, %v705
      %v726 = vmul.f32 %v247, %v705
      %v727 = vmul.f32 %v248, %v705
      %v728 = vmul.f32 %v249, %v705
      %v729 = vmul.f32 %v250, %v705
      %v754 = vrot.slane %v706, 2
      %v755 = vrot.slane %v707, 2
      %v756 = vsel %vm469, %v754, %v755
      %v757 = vrot.slane %v708, 2
      %v758 = vsel %vm469, %v755, %v757
      %v759 = vrot.slane %v709, 2
      %v760 = vrot.slane %v710, 2
      %v761 = vsel %vm469, %v759, %v760
      %v762 = vrot.slane %v711, 2
      %v763 = vsel %vm469, %v760, %v762
      %v764 = vrot.slane %v712, 2
      %v765 = vrot.slane %v713, 2
      %v766 = vsel %vm469, %v764, %v765
      %v767 = vrot.slane %v714, 2
      %v768 = vsel %vm469, %v765, %v767
      %v769 = vrot.slane %v715, 2
      %v770 = vrot.slane %v716, 2
      %v771 = vsel %vm469, %v769, %v770
      %v772 = vrot.slane %v717, 2
      %v773 = vsel %vm469, %v770, %v772
      %v774 = vrot.slane %v718, 2
      %v775 = vrot.slane %v719, 2
      %v776 = vsel %vm469, %v774, %v775
      %v777 = vrot.slane %v720, 2
      %v778 = vsel %vm469, %v775, %v777
      %v779 = vrot.slane %v721, 2
      %v780 = vrot.slane %v722, 2
      %v781 = vsel %vm469, %v779, %v780
      %v782 = vrot.slane %v723, 2
      %v783 = vsel %vm469, %v780, %v782
      %v784 = vrot.slane %v724, 2
      %v785 = vrot.slane %v725, 2
      %v786 = vsel %vm469, %v784, %v785
      %v787 = vrot.slane %v726, 2
      %v788 = vsel %vm469, %v785, %v787
      %v789 = vrot.slane %v727, 2
      %v790 = vrot.slane %v728, 2
      %v791 = vsel %vm469, %v789, %v790
      %v792 = vrot.slane %v729, 2
      %v793 = vsel %vm469, %v790, %v792
      %v810 = vadd.f32 %v686, %v756
      %v811 = vadd.f32 %v687, %v758
      %v812 = vadd.f32 %v688, %v761
      %v813 = vadd.f32 %v689, %v763
      %v814 = vadd.f32 %v690, %v766
      %v815 = vadd.f32 %v691, %v768
      %v816 = vadd.f32 %v692, %v771
      %v817 = vadd.f32 %v693, %v773
      %v818 = vadd.f32 %v694, %v776
      %v819 = vadd.f32 %v695, %v778
      %v820 = vadd.f32 %v696, %v781
      %v821 = vadd.f32 %v697, %v783
      %v822 = vadd.f32 %v698, %v786
      %v823 = vadd.f32 %v699, %v788
      %v824 = vadd.f32 %v700, %v791
      %v825 = vadd.f32 %v701, %v793
      %v826 = vlaneseq
      %v827 = vshrl.u32 %v826, 7
      %v828 = vsub.s32 6, %v827
      %v829 = vrot.slane %v254, %v828
      %v830 = vmul.f32 %v230, %v829
      %v831 = vmul.f32 %v231, %v829
      %v832 = vmul.f32 %v233, %v829
      %v833 = vmul.f32 %v234, %v829
      %v834 = vmul.f32 %v236, %v829
      %v835 = vmul.f32 %v237, %v829
      %v836 = vmul.f32 %v239, %v829
      %v837 = vmul.f32 %v240, %v829
      %v838 = vmul.f32 %v242, %v829
      %v839 = vmul.f32 %v243, %v829
      %v840 = vmul.f32 %v245, %v829
      %v841 = vmul.f32 %v246, %v829
      %v842 = vmul.f32 %v248, %v829
      %v843 = vmul.f32 %v249, %v829
      %v844 = vmul.f32 %v251, %v829
      %v845 = vmul.f32 %v252, %v829
      %v846 = vadd.f32 %v810, %v830
      %v847 = vadd.f32 %v811, %v831
      %v848 = vadd.f32 %v812, %v832
      %v849 = vadd.f32 %v813, %v833
      %v850 = vadd.f32 %v814, %v834
      %v851 = vadd.f32 %v815, %v835
      %v852 = vadd.f32 %v816, %v836
      %v853 = vadd.f32 %v817, %v837
      %v854 = vadd.f32 %v818, %v838
      %v855 = vadd.f32 %v819, %v839
      %v856 = vadd.f32 %v820, %v840
      %v857 = vadd.f32 %v821, %v841
      %v858 = vadd.f32 %v822, %v842
      %v859 = vadd.f32 %v823, %v843
      %v860 = vadd.f32 %v824, %v844
      %v861 = vadd.f32 %v825, %v845
      %v862 = vlaneseq
      %v863 = vshrl.u32 %v862, 7
      %v864 = vsub.s32 7, %v863
      %v865 = vrot.slane %v254, %v864
      %v866 = vmul.f32 %v230, %v865
      %v867 = vmul.f32 %v231, %v865
      %v868 = vmul.f32 %v232, %v865
      %v869 = vmul.f32 %v233, %v865
      %v870 = vmul.f32 %v234, %v865
      %v871 = vmul.f32 %v235, %v865
      %v872 = vmul.f32 %v236, %v865
      %v873 = vmul.f32 %v237, %v865
      %v874 = vmul.f32 %v238, %v865
      %v875 = vmul.f32 %v239, %v865
      %v876 = vmul.f32 %v240, %v865
      %v877 = vmul.f32 %v241, %v865
      %v878 = vmul.f32 %v242, %v865
      %v879 = vmul.f32 %v243, %v865
      %v880 = vmul.f32 %v244, %v865
      %v881 = vmul.f32 %v245, %v865
      %v882 = vmul.f32 %v246, %v865
      %v883 = vmul.f32 %v247, %v865
      %v884 = vmul.f32 %v248, %v865
      %v885 = vmul.f32 %v249, %v865
      %v886 = vmul.f32 %v250, %v865
      %v887 = vmul.f32 %v251, %v865
      %v888 = vmul.f32 %v252, %v865
      %v889 = vmul.f32 %v253, %v865
      %v914 = vrot.slane %v866, 1
      %v915 = vrot.slane %v867, 1
      %v916 = vsel %vm344, %v914, %v915
      %v917 = vrot.slane %v868, 1
      %v918 = vsel %vm344, %v915, %v917
      %v919 = vrot.slane %v869, 1
      %v920 = vrot.slane %v870, 1
      %v921 = vsel %vm344, %v919, %v920
      %v922 = vrot.slane %v871, 1
      %v923 = vsel %vm344, %v920, %v922
      %v924 = vrot.slane %v872, 1
      %v925 = vrot.slane %v873, 1
      %v926 = vsel %vm344, %v924, %v925
      %v927 = vrot.slane %v874, 1
      %v928 = vsel %vm344, %v925, %v927
      %v929 = vrot.slane %v875, 1
      %v930 = vrot.slane %v876, 1
      %v931 = vsel %vm344, %v929, %v930
      %v932 = vrot.slane %v877, 1
      %v933 = vsel %vm344, %v930, %v932
      %v934 = vrot.slane %v878, 1
      %v935 = vrot.slane %v879, 1
      %v936 = vsel %vm344, %v934, %v935
      %v937 = vrot.slane %v880, 1
      %v938 = vsel %vm344, %v935, %v937
      %v939 = vrot.slane %v881, 1
      %v940 = vrot.slane %v882, 1
      %v941 = vsel %vm344, %v939, %v940
      %v942 = vrot.slane %v883, 1
      %v943 = vsel %vm344, %v940, %v942
      %v944 = vrot.slane %v884, 1
      %v945 = vrot.slane %v885, 1
      %v946 = vsel %vm344, %v944, %v945
      %v947 = vrot.slane %v886, 1
      %v948 = vsel %vm344, %v945, %v947
      %v949 = vrot.slane %v887, 1
      %v950 = vrot.slane %v888, 1
      %v951 = vsel %vm344, %v949, %v950
      %v952 = vrot.slane %v889, 1
      %v953 = vsel %vm344, %v950, %v952
      %v970 = vadd.f32 %v846, %v916
      %v971 = vadd.f32 %v847, %v918
      %v972 = vadd.f32 %v848, %v921
      %v973 = vadd.f32 %v849, %v923
      %v974 = vadd.f32 %v850, %v926
      %v975 = vadd.f32 %v851, %v928
      %v976 = vadd.f32 %v852, %v931
      %v977 = vadd.f32 %v853, %v933
      %v978 = vadd.f32 %v854, %v936
      %v979 = vadd.f32 %v855, %v938
      %v980 = vadd.f32 %v856, %v941
      %v981 = vadd.f32 %v857, %v943
      %v982 = vadd.f32 %v858, %v946
      %v983 = vadd.f32 %v859, %v948
      %v984 = vadd.f32 %v860, %v951
      %v985 = vadd.f32 %v861, %v953
      %v986 = vlaneseq
      %v987 = vshrl.u32 %v986, 7
      %v988 = vsub.s32 0, %v987
      %v989 = vrot.slane %v255, %v988
      %v990 = vmul.f32 %v230, %v989
      %v991 = vmul.f32 %v231, %v989
      %v992 = vmul.f32 %v232, %v989
      %v993 = vmul.f32 %v233, %v989
      %v994 = vmul.f32 %v234, %v989
      %v995 = vmul.f32 %v235, %v989
      %v996 = vmul.f32 %v236, %v989
      %v997 = vmul.f32 %v237, %v989
      %v998 = vmul.f32 %v238, %v989
      %v999 = vmul.f32 %v239, %v989
      %v1000 = vmul.f32 %v240, %v989
      %v1001 = vmul.f32 %v241, %v989
      %v1002 = vmul.f32 %v242, %v989
      %v1003 = vmul.f32 %v243, %v989
      %v1004 = vmul.f32 %v244, %v989
      %v1005 = vmul.f32 %v245, %v989
      %v1006 = vmul.f32 %v246, %v989
      %v1007 = vmul.f32 %v247, %v989
      %v1008 = vmul.f32 %v248, %v989
      %v1009 = vmul.f32 %v249, %v989
      %v1010 = vmul.f32 %v250, %v989
      %v1011 = vmul.f32 %v251, %v989
      %v1012 = vmul.f32 %v252, %v989
      %v1013 = vmul.f32 %v253, %v989
      %v1038 = vrot.slane %v990, 2
      %v1039 = vrot.slane %v991, 2
      %v1040 = vsel %vm469, %v1038, %v1039
      %v1041 = vrot.slane %v992, 2
      %v1042 = vsel %vm469, %v1039, %v1041
      %v1043 = vrot.slane %v993, 2
      %v1044 = vrot.slane %v994, 2
      %v1045 = vsel %vm469, %v1043, %v1044
      %v1046 = vrot.slane %v995, 2
      %v1047 = vsel %vm469, %v1044, %v1046
      %v1048 = vrot.slane %v996, 2
      %v1049 = vrot.slane %v997, 2
      %v1050 = vsel %vm469, %v1048, %v1049
      %v1051 = vrot.slane %v998, 2
      %v1052 = vsel %vm469, %v1049, %v1051
      %v1053 = vrot.slane %v999, 2
      %v1054 = vrot.slane %v1000, 2
      %v1055 = vsel %vm469, %v1053, %v1054
      %v1056 = vrot.slane %v1001, 2
      %v1057 = vsel %vm469, %v1054, %v1056
      %v1058 = vrot.slane %v1002, 2
      %v1059 = vrot.slane %v1003, 2
      %v1060 = vsel %vm469, %v1058, %v1059
      %v1061 = vrot.slane %v1004, 2
      %v1062 = vsel %vm469, %v1059, %v1061
      %v1063 = vrot.slane %v1005, 2
      %v1064 = vrot.slane %v1006, 2
      %v1065 = vsel %vm469, %v1063, %v1064
      %v1066 = vrot.slane %v1007, 2
      %v1067 = vsel %vm469, %v1064, %v1066
      %v1068 = vrot.slane %v1008, 2
      %v1069 = vrot.slane %v1009, 2
      %v1070 = vsel %vm469, %v1068, %v1069
      %v1071 = vrot.slane %v1010, 2
      %v1072 = vsel %vm469, %v1069, %v1071
      %v1073 = vrot.slane %v1011, 2
      %v1074 = vrot.slane %v1012, 2
      %v1075 = vsel %vm469, %v1073, %v1074
      %v1076 = vrot.slane %v1013, 2
      %v1077 = vsel %vm469, %v1074, %v1076
      %v1094 = vadd.f32 %v970, %v1040
      %v1095 = vadd.f32 %v971, %v1042
      %v1096 = vadd.f32 %v972, %v1045
      %v1097 = vadd.f32 %v973, %v1047
      %v1098 = vadd.f32 %v974, %v1050
      %v1099 = vadd.f32 %v975, %v1052
      %v1100 = vadd.f32 %v976, %v1055
      %v1101 = vadd.f32 %v977, %v1057
      %v1102 = vadd.f32 %v978, %v1060
      %v1103 = vadd.f32 %v979, %v1062
      %v1104 = vadd.f32 %v980, %v1065
      %v1105 = vadd.f32 %v981, %v1067
      %v1106 = vadd.f32 %v982, %v1070
      %v1107 = vadd.f32 %v983, %v1072
      %v1108 = vadd.f32 %v984, %v1075
      %v1109 = vadd.f32 %v985, %v1077
      %v1110 = vld [vmem:[%s2] sm:$0xf]
      %v1111 = vld [vmem:[%s3] sm:$0x1]
      %v1113 = vlaneseq
      %v1114 = vshrl.u32 %v1113, 7
      %v1115 = vsub.s32 0, %v1114
      %v1116 = vrot.slane %v1111, %v1115
      %vm1118 = vcmask 31744
      %v1120 = vsel %vm1118, %v1094, 0
      %v1123 = vsel %vm1118, %v1095, 0
      %v1126 = vsel %vm1118, %v1096, 0
      %v1129 = vsel %vm1118, %v1097, 0
      %v1132 = vsel %vm1118, %v1098, 0
      %v1135 = vsel %vm1118, %v1099, 0
      %v1138 = vsel %vm1118, %v1100, 0
      %v1141 = vsel %vm1118, %v1101, 0
      %v1144 = vsel %vm1118, %v1102, 0
      %v1147 = vsel %vm1118, %v1103, 0
      %v1150 = vsel %vm1118, %v1104, 0
      %v1153 = vsel %vm1118, %v1105, 0
      %v1156 = vsel %vm1118, %v1106, 0
      %v1159 = vsel %vm1118, %v1107, 0
      %v1162 = vsel %vm1118, %v1108, 0
      %v1165 = vsel %vm1118, %v1109, 0
      %vm1167 = vcmask 1043456
      %v1169 = vsel %vm1167, %v1110, 0
      %1171 = vmatprep.subr.mxu0 0.0
      %1172 = vmatpush1.msra.mxu0 %v1169
      %1173 = vmatprep.subr.mxu0 0.0
      %1174 = vmatpush1.msra.mxu0 0.0
      %1175 = vmatprep.subr.mxu0 0.0
      %1176 = vmatpush1.msra.mxu0 0.0
      %1177 = vmatprep.subr.mxu0 0.0
      %1178 = vmatpush1.msra.mxu0 0.0
      %1179 = vmatprep.subr.mxu0 0.0
      %1180 = vmatpush1.msra.mxu0 0.0
      %1181 = vmatprep.subr.mxu0 0.0
      %1182 = vmatpush1.msra.mxu0 0.0
      %1183 = vmatprep.subr.mxu0 0.0
      %1184 = vmatpush1.msra.mxu0 0.0
      %1185 = vmatprep.subr.mxu0 0.0
      %1186 = vmatpush1.msra.mxu0 0.0
      %1187 = vmatprep.subr.mxu0 0.0
      %1188 = vmatpush1.msra.mxu0 0.0
      %1189 = vmatprep.subr.mxu0 0.0
      %1190 = vmatpush1.msra.mxu0 0.0
      %1191 = vmatprep.subr.mxu0 0.0
      %1192 = vmatpush1.msra.mxu0 0.0
      %1193 = vmatprep.subr.mxu0 0.0
      %1194 = vmatpush1.msra.mxu0 0.0
      %1195 = vmatprep.subr.mxu0 0.0
      %1196 = vmatpush1.msra.mxu0 0.0
      %1197 = vmatprep.subr.mxu0 0.0
      %1198 = vmatpush1.msra.mxu0 0.0
      %1199 = vmatprep.subr.mxu0 0.0
      %1200 = vmatpush1.msra.mxu0 0.0
      %1201 = vmatprep.subr.mxu0 0.0
      %1202 = vmatpush1.msra.mxu0 0.0
      %1203 = vmatprep.subr.mxu0 0.0
      %1204 = vmatpush1.msra.mxu0 0.0
      %1205 = vmatprep.subr.mxu0 0.0
      %1206 = vmatpush1.msra.mxu0 0.0
      %1207 = vmatprep.subr.mxu0 0.0
      %1208 = vmatpush1.msra.mxu0 0.0
      %1209 = vmatprep.subr.mxu0 0.0
      %1210 = vmatpush1.msra.mxu0 0.0
      %1211 = vmatprep.subr.mxu0 0.0
      %1212 = vmatpush1.msra.mxu0 0.0
      %1213 = vmatprep.subr.mxu0 0.0
      %1214 = vmatpush1.msra.mxu0 0.0
      %1215 = vmatprep.subr.mxu0 0.0
      %1216 = vmatpush1.msra.mxu0 0.0
      %1217 = vmatprep.subr.mxu0 0.0
      %1218 = vmatpush1.msra.mxu0 0.0
      %1219 = vmatprep.subr.mxu0 0.0
      %1220 = vmatpush1.msra.mxu0 0.0
      %1221 = vmatprep.subr.mxu0 0.0
      %1222 = vmatpush1.msra.mxu0 0.0
      %1223 = vmatprep.subr.mxu0 0.0
      %1224 = vmatpush1.msra.mxu0 0.0
      %1225 = vmatprep.subr.mxu0 0.0
      %1226 = vmatpush1.msra.mxu0 0.0
      %1227 = vmatprep.subr.mxu0 0.0
      %1228 = vmatpush1.msra.mxu0 0.0
      %1229 = vmatprep.subr.mxu0 0.0
      %1230 = vmatpush1.msra.mxu0 0.0
      %1231 = vmatprep.subr.mxu0 0.0
      %1232 = vmatpush1.msra.mxu0 0.0
      %1233 = vmatprep.subr.mxu0 0.0
      %1234 = vmatpush1.msra.mxu0 0.0
      %1235 = vmatprep.mubr.f32.mxu0 0.0
      %1236 = vmatmul.mubr.f32.gmra.mrb[0].mxu0 %v1120
      %v1237 = vpop.f32.mrb[0].mxu0
      %v1238 = vadd.f32 %v1116, %v1237
      %v1239 = vpop.f32.mrb[0].mxu0
      %1240 = vmatprep.mubr.f32.mxu0 0.0
      %1241 = vmatmul.mubr.f32.gmra.mrb[0].mxu0 %v1123
      %v1242 = vpop.f32.mrb[0].mxu0
      %v1243 = vadd.f32 %v1116, %v1242
      %v1244 = vpop.f32.mrb[0].mxu0
      %1245 = vmatprep.mubr.f32.mxu0 0.0
      %1246 = vmatmul.mubr.f32.gmra.mrb[0].mxu0 %v1126
      %v1247 = vpop.f32.mrb[0].mxu0
      %v1248 = vadd.f32 %v1116, %v1247
      %v1249 = vpop.f32.mrb[0].mxu0
      %1250 = vmatprep.mubr.f32.mxu0 0.0
      %1251 = vmatmul.mubr.f32.gmra.mrb[0].mxu0 %v1129
      %v1252 = vpop.f32.mrb[0].mxu0
      %v1253 = vadd.f32 %v1116, %v1252
      %v1254 = vpop.f32.mrb[0].mxu0
      %1255 = vmatprep.mubr.f32.mxu0 0.0
      %1256 = vmatmul.mubr.f32.gmra.mrb[0].mxu0 %v1132
      %v1257 = vpop.f32.mrb[0].mxu0
      %v1258 = vadd.f32 %v1116, %v1257
      %v1259 = vpop.f32.mrb[0].mxu0
      %1260 = vmatprep.mubr.f32.mxu0 0.0
      %1261 = vmatmul.mubr.f32.gmra.mrb[0].mxu0 %v1135
      %v1262 = vpop.f32.mrb[0].mxu0
      %v1263 = vadd.f32 %v1116, %v1262
      %v1264 = vpop.f32.mrb[0].mxu0
      %1265 = vmatprep.mubr.f32.mxu0 0.0
      %1266 = vmatmul.mubr.f32.gmra.mrb[0].mxu0 %v1138
      %v1267 = vpop.f32.mrb[0].mxu0
      %v1268 = vadd.f32 %v1116, %v1267
      %v1269 = vpop.f32.mrb[0].mxu0
      %1270 = vmatprep.mubr.f32.mxu0 0.0
      %1271 = vmatmul.mubr.f32.gmra.mrb[0].mxu0 %v1141
      %v1272 = vpop.f32.mrb[0].mxu0
      %v1273 = vadd.f32 %v1116, %v1272
      %v1274 = vpop.f32.mrb[0].mxu0
      %1275 = vmatprep.mubr.f32.mxu0 0.0
      %1276 = vmatmul.mubr.f32.gmra.mrb[0].mxu0 %v1144
      %v1277 = vpop.f32.mrb[0].mxu0
      %v1278 = vadd.f32 %v1116, %v1277
      %v1279 = vpop.f32.mrb[0].mxu0
      %1280 = vmatprep.mubr.f32.mxu0 0.0
      %1281 = vmatmul.mubr.f32.gmra.mrb[0].mxu0 %v1147
      %v1282 = vpop.f32.mrb[0].mxu0
      %v1283 = vadd.f32 %v1116, %v1282
      %v1284 = vpop.f32.mrb[0].mxu0
      %1285 = vmatprep.mubr.f32.mxu0 0.0
      %1286 = vmatmul.mubr.f32.gmra.mrb[0].mxu0 %v1150
      %v1287 = vpop.f32.mrb[0].mxu0
      %v1288 = vadd.f32 %v1116, %v1287
      %v1289 = vpop.f32.mrb[0].mxu0
      %1290 = vmatprep.mubr.f32.mxu0 0.0
      %1291 = vmatmul.mubr.f32.gmra.mrb[0].mxu0 %v1153
      %v1292 = vpop.f32.mrb[0].mxu0
      %v1293 = vadd.f32 %v1116, %v1292
      %v1294 = vpop.f32.mrb[0].mxu0
      %1295 = vmatprep.mubr.f32.mxu0 0.0
      %1296 = vmatmul.mubr.f32.gmra.mrb[0].mxu0 %v1156
      %v1297 = vpop.f32.mrb[0].mxu0
      %v1298 = vadd.f32 %v1116, %v1297
      %v1299 = vpop.f32.mrb[0].mxu0
      %1300 = vmatprep.mubr.f32.mxu0 0.0
      %1301 = vmatmul.mubr.f32.gmra.mrb[0].mxu0 %v1159
      %v1302 = vpop.f32.mrb[0].mxu0
      %v1303 = vadd.f32 %v1116, %v1302
      %v1304 = vpop.f32.mrb[0].mxu0
      %1305 = vmatprep.mubr.f32.mxu0 0.0
      %1306 = vmatmul.mubr.f32.gmra.mrb[0].mxu0 %v1162
      %v1307 = vpop.f32.mrb[0].mxu0
      %v1308 = vadd.f32 %v1116, %v1307
      %v1309 = vpop.f32.mrb[0].mxu0
      %1310 = vmatprep.mubr.f32.mxu0 0.0
      %1311 = vmatmul.mubr.f32.gmra.mrb[0].mxu0 %v1165
      %v1312 = vpop.f32.mrb[0].mxu0
      %v1313 = vadd.f32 %v1116, %v1312
      %v1314 = vpop.f32.mrb[0].mxu0
      %1315 = vdwg.mxu0
      %vm1316 = vcmask 64512
      %1317 = vst.msk [vmem:[%s219] sm:$0xff] %vm1316, %v1238
      %1318 = vst.msk [vmem:[%s219 + $0x8] sm:$0xff] %vm1316, %v1243
      %1319 = vst.msk [vmem:[%s219 + $0x10] sm:$0xff] %vm1316, %v1248
      %1320 = vst.msk [vmem:[%s219 + $0x18] sm:$0xff] %vm1316, %v1253
      %1321 = vst.msk [vmem:[%s219 + $0x20] sm:$0xff] %vm1316, %v1258
      %1322 = vst.msk [vmem:[%s219 + $0x28] sm:$0xff] %vm1316, %v1263
      %1323 = vst.msk [vmem:[%s219 + $0x30] sm:$0xff] %vm1316, %v1268
      %1324 = vst.msk [vmem:[%s219 + $0x38] sm:$0xff] %vm1316, %v1273
      %1325 = vst.msk [vmem:[%s219 + $0x40] sm:$0xff] %vm1316, %v1278
      %1326 = vst.msk [vmem:[%s219 + $0x48] sm:$0xff] %vm1316, %v1283
      %1327 = vst.msk [vmem:[%s219 + $0x50] sm:$0xff] %vm1316, %v1288
      %1328 = vst.msk [vmem:[%s219 + $0x58] sm:$0xff] %vm1316, %v1293
      %1329 = vst.msk [vmem:[%s219 + $0x60] sm:$0xff] %vm1316, %v1298
      %1330 = vst.msk [vmem:[%s219 + $0x68] sm:$0xff] %vm1316, %v1303
      %1331 = vst.msk [vmem:[%s219 + $0x70] sm:$0xff] %vm1316, %v1308
      %1332 = vst.msk [vmem:[%s219 + $0x78] sm:$0xff] %vm1316, %v1313
      %s1333 = smul.u32 16, %s20
      %p1334 = scmp.lt.s32.totalorder %s19, 1
      %s1335 = scalar_select %p1334, %s19, 1
      %p1336 = scmp.lt.s32.totalorder %s1333, 31
      %s1337 = scalar_select %p1336, %s1333, 31
      %s1338 = smul.addr %s1335, 32
      %s1339 = sadd.s32 %s1337, %s1338
      %s1340 = smul.addr %s1339, 8
      %s1341 = scalar_lea.vmem %s4, %s1340
      // Predicated region
      $region37: #{tpu_custom_call.1} parent=35 // pred_check
        %p1342 = pneg %p136
      $region38: #{tpu_custom_call.1} parent=35 // pred_check_branch
        %1344 = sbr.rel (%p1342) target = $region40
      $region39: #{tpu_custom_call.1} parent=35 // pred_region
        %s1345 = smul.u32 16, %s20
      $region40: #{tpu_custom_call.1} parent=35 // pred_fallthru
        _
    $region36: #{tpu_custom_call.1} parent=5 // pred_fallthru
      _
    %p1346 = scmp.le.s32.totalorder 2, %s10
    // Predicated region
    $region41: #{tpu_custom_call.1} parent=5 // pred_check
      %p1347 = pneg %p1346
    $region42: #{tpu_custom_call.1} parent=5 // pred_check_branch
      %1349 = sbr.rel (%p1347) target = $region44
    $region43: #{tpu_custom_call.1} parent=5 // pred_region
      %s1350 = ssub.s32 %s10, 2
      // Predicated region
      $region45: #{tpu_custom_call.1} parent=43 // pred_check
        %p1351 = pneg %p142
      $region46: #{tpu_custom_call.1} parent=43 // pred_check_branch
        %1353 = sbr.rel (%p1351) target = $region48
      $region47: #{tpu_custom_call.1} parent=43 // pred_region
        %s1354 = smul.u32 16, %s22
        %p1355 = scmp.lt.s32.totalorder %s21, 1
        %s1356 = scalar_select %p1355, %s21, 1
        %p1357 = scmp.lt.s32.totalorder %s1354, 31
        %s1358 = scalar_select %p1357, %s1354, 31
        %s1359 = smul.addr %s1356, 32
        %s1360 = sadd.s32 %s1358, %s1359
        %s1361 = smul.addr %s1360, 8
        %s1362 = scalar_lea.vmem %s4, %s1361
      $region48: #{tpu_custom_call.1} parent=43 // pred_fallthru
        _
    $region44: #{tpu_custom_call.1} parent=5 // pred_fallthru
      _
  $region6: #{tpu_custom_call.1} parent=0 // loop_footer
    %s14 = sadd.s32 1, %s10
  $region7: #{tpu_custom_call.1} parent=0 // loop_footer_branch
    %9 = sbr.rel target = $region3
  $region8: #{tpu_custom_call.1} parent=0 // loop_exit
    _

</llo_original>
